<compile_context>
chip_gen: v5e
topology: v5e:2x2
jax: 0.10.0
libtpu: 0.0.40
codegen_flags: <defaults>
</compile_context>

<pallas_src>
import functools

import jax
import jax.numpy as jnp
from jax.experimental import pallas as pl
from jax.experimental.pallas import tpu as pltpu

PAIRWISE_EPS = 1e-6  # torch F.pairwise_distance default eps (added to the difference)


def _round_up(x, m):
    return (x + m - 1) // m * m


def _contrastive_loss_kernel(o1_ref, o2_ref, lab_ref, loss_ref, acc_ref, *,
                             batch, margin, needs_mask):
    i = pl.program_id(0)
    n_steps = pl.num_programs(0)

    @pl.when(i == 0)
    def _init():
        acc_ref[...] = jnp.zeros_like(acc_ref)

    o1 = o1_ref[...].astype(jnp.float32)        # (TB, D)
    o2 = o2_ref[...].astype(jnp.float32)        # (TB, D)
    lab = lab_ref[...].astype(jnp.float32)      # (TB, 1)

    # Euclidean (p=2) pairwise distance with torch's eps-on-difference behavior.
    diff = o1 - o2 + PAIRWISE_EPS
    dist_sq = jnp.sum(diff * diff, axis=-1, keepdims=True)    # (TB, 1)
    dist = jnp.sqrt(dist_sq)                                  # (TB, 1) -- EUP

    # (1 - label) * d^2 + label * clamp(margin - d, 0)^2   (d^2 taken from dist_sq directly)
    per_sample = (1.0 - lab) * dist_sq + lab * jnp.square(
        jnp.maximum(margin - dist, 0.0))                      # (TB, 1)

    if needs_mask:
        # Mask rows past the true batch size (ragged tail tile).
        tb = per_sample.shape[0]
        row = i * tb + jax.lax.broadcasted_iota(jnp.int32, per_sample.shape, 0)
        per_sample = jnp.where(row < batch, per_sample, 0.0)

    acc_ref[...] += jnp.sum(per_sample, keepdims=True)        # (1, 1)

    @pl.when(i == n_steps - 1)
    def _finalize():
        loss_ref[...] = acc_ref[...] * (1.0 / batch)


def contrastive_loss(output1, output2, label, *, margin=3.0, block_rows=512):
    """output1, output2: (B, D); label: (B, 1). Returns scalar (shape ()) f32 loss."""
    B, D = output1.shape
    assert output2.shape == (B, D)
    assert label.shape == (B, 1)

    itemsize = jnp.dtype(output1.dtype).itemsize
    # Sublane alignment: 8 rows for f32, 16 for bf16, 32 for 8-bit.
    align = max(8, 32 // itemsize)

    # Keep 2 inputs x 2 pipeline buffers x (TB, D) blocks under ~16 MiB
    # (safe for v5e's default scoped VMEM and v7x's 64 MiB physical VMEM).
    vmem_budget = 16 * 1024 * 1024
    bytes_per_row = 2 * 2 * D * itemsize
    tb_cap = max(align, (vmem_budget // bytes_per_row) // align * align)

    TB = min(_round_up(B, align), _round_up(block_rows, align), tb_cap)
    num_tiles = pl.cdiv(B, TB)
    needs_mask = (B % TB) != 0

    kernel = functools.partial(
        _contrastive_loss_kernel,
        batch=B,
        margin=float(margin),
        needs_mask=needs_mask,
    )

    out = pl.pallas_call(
        kernel,
        out_shape=jax.ShapeDtypeStruct((1, 1), jnp.float32),
        grid=(num_tiles,),
        in_specs=[
            pl.BlockSpec((TB, D), lambda i: (i, 0)),
            pl.BlockSpec((TB, D), lambda i: (i, 0)),
            pl.BlockSpec((TB, 1), lambda i: (i, 0)),
        ],
        out_specs=pl.BlockSpec((1, 1), lambda i: (0, 0)),
        scratch_shapes=[pltpu.VMEM((1, 1), jnp.float32)],
        compiler_params=pltpu.CompilerParams(
            dimension_semantics=("arbitrary",),   # resident accumulator across B-tiles
            vmem_limit_bytes=32 * 1024 * 1024,
        ),
    )(output1, output2, label)
    return out[0, 0]


def _reference_loss(output1, output2, label, margin=3.0):
    # Plain-JAX reference mirroring the torch module.
    diff = output1.astype(jnp.float32) - output2.astype(jnp.float32) + PAIRWISE_EPS
    dist = jnp.sqrt(jnp.sum(diff * diff, axis=-1, keepdims=True))
    lab = label.astype(jnp.float32)
    loss = (1.0 - lab) * jnp.square(dist) + lab * jnp.square(
        jnp.maximum(margin - dist, 0.0))
    return jnp.mean(loss)


if __name__ == "__main__":
    key = jax.random.PRNGKey(0)

    # Test 1: small, aligned shapes (single tile, no tail mask emitted).
    k1, k2, k3 = jax.random.split(key, 3)
    B, D = 8, 32
    o1 = jax.random.normal(k1, (B, D), dtype=jnp.float32)
    o2 = jax.random.normal(k2, (B, D), dtype=jnp.float32)
    lab = jax.random.bernoulli(k3, p=0.5, shape=(B, 1)).astype(jnp.float32)

    loss = contrastive_loss(o1, o2, lab)
    jax.block_until_ready(loss)
    ref = _reference_loss(o1, o2, lab)
    assert jnp.allclose(loss, ref, rtol=1e-5, atol=1e-5), (loss, ref)

    # Test 2: multi-tile grid with a ragged tail (B not a multiple of the tile).
    k4, k5, k6 = jax.random.split(jax.random.PRNGKey(1), 3)
    B2, D2 = 13, 128
    o1b = jax.random.normal(k4, (B2, D2), dtype=jnp.float32)
    o2b = jax.random.normal(k5, (B2, D2), dtype=jnp.float32)
    labb = jax.random.bernoulli(k6, p=0.5, shape=(B2, 1)).astype(jnp.float32)

    loss2 = contrastive_loss(o1b, o2b, labb, block_rows=8)  # force 2 grid steps + masked tail
    jax.block_until_ready(loss2)
    ref2 = _reference_loss(o1b, o2b, labb)
    assert jnp.allclose(loss2, ref2, rtol=1e-5, atol=1e-5), (loss2, ref2)

    # Test 3: bf16 inputs, larger multi-tile batch (accumulation in f32).
    k7, k8, k9 = jax.random.split(jax.random.PRNGKey(2), 3)
    B3, D3 = 1024, 256
    o1c = jax.random.normal(k7, (B3, D3), dtype=jnp.bfloat16)
    o2c = jax.random.normal(k8, (B3, D3), dtype=jnp.bfloat16)
    labc = jax.random.bernoulli(k9, p=0.5, shape=(B3, 1)).astype(jnp.bfloat16)

    loss3 = contrastive_loss(o1c, o2c, labc, block_rows=256)
    jax.block_until_ready(loss3)
    ref3 = _reference_loss(o1c, o2c, labc)
    assert jnp.allclose(loss3, ref3, rtol=2e-2, atol=2e-2), (loss3, ref3)

    print("KERNEL_OK")
</pallas_src>

<mosaic_0001>
module attributes {stable_mosaic.version = 11 : i64} {
  func.func @_contrastive_loss_kernel(%arg0: i32, %arg1: memref<8x32xf32, #tpu.memory_space<vmem>>, %arg2: memref<8x32xf32, #tpu.memory_space<vmem>>, %arg3: memref<8x1xf32, #tpu.memory_space<vmem>>, %arg4: memref<1x1xf32, #tpu.memory_space<vmem>>, %arg5: memref<1x1xf32, #tpu.memory_space<vmem>>) attributes {dimension_semantics = [#tpu.dimension_semantics<arbitrary>], iteration_bounds = array<i64: 1>, scalar_prefetch = 0 : i64, scratch_operands = 1 : i64, tpu.core_type = #tpu.core_type<tc>, window_params = [{transform_indices = @transform_0, window_bounds = array<i64: 8, 32>}, {transform_indices = @transform_1, window_bounds = array<i64: 8, 32>}, {transform_indices = @transform_2, window_bounds = array<i64: 8, 1>}, {pipeline_mode = #tpu.pipeline_mode<synchronous>, transform_indices = @transform_3, window_bounds = array<i64: 1, 1>}]} {
    %c0_i32 = arith.constant 0 : i32
    %0 = arith.cmpi eq, %arg0, %c0_i32 : i32
    %1 = arith.extui %0 : i1 to i32
    %c0_i32_0 = arith.constant 0 : i32
    %2 = arith.cmpi ne, %1, %c0_i32_0 : i32
    scf.if %2 {
      %cst_17 = arith.constant 0.000000e+00 : f32
      %34 = vector.broadcast %cst_17 : f32 to vector<1x1xf32>
      %c0_18 = arith.constant 0 : index
      %c0_19 = arith.constant 0 : index
      %35 = vector.load %arg5[%c0_18, %c0_19] : memref<1x1xf32, #tpu.memory_space<vmem>>, vector<1x1xf32>
      tpu.vector_store %arg5[%c0_18, %c0_19], %34 {strides = array<i32>} : memref<1x1xf32, #tpu.memory_space<vmem>>, vector<1x1xf32>,
    } else {
    }
    %c0 = arith.constant 0 : index
    %c0_1 = arith.constant 0 : index
    %3 = vector.load %arg1[%c0, %c0_1] : memref<8x32xf32, #tpu.memory_space<vmem>>, vector<8x32xf32>
    %c0_2 = arith.constant 0 : index
    %c0_3 = arith.constant 0 : index
    %4 = vector.load %arg2[%c0_2, %c0_3] : memref<8x32xf32, #tpu.memory_space<vmem>>, vector<8x32xf32>
    %c0_4 = arith.constant 0 : index
    %c0_5 = arith.constant 0 : index
    %5 = vector.load %arg3[%c0_4, %c0_5] : memref<8x1xf32, #tpu.memory_space<vmem>>, vector<8x1xf32>
    %6 = arith.subf %3, %4 : vector<8x32xf32>
    %cst = arith.constant 9.99999997E-7 : f32
    %7 = vector.broadcast %cst : f32 to vector<8x32xf32>
    %8 = arith.addf %6, %7 : vector<8x32xf32>
    %9 = arith.mulf %8, %8 : vector<8x32xf32>
    %cst_6 = arith.constant dense<0.000000e+00> : vector<8xf32>
    %10 = vector.multi_reduction <add>, %9, %cst_6 [1] : vector<8x32xf32> to vector<8xf32>
    %11 = vector.shape_cast %10 : vector<8xf32> to vector<8x1xf32>
    %12 = math.sqrt %11 : vector<8x1xf32>
    %cst_7 = arith.constant 1.000000e+00 : f32
    %13 = vector.broadcast %cst_7 : f32 to vector<8x1xf32>
    %14 = arith.subf %13, %5 : vector<8x1xf32>
    %15 = arith.mulf %14, %11 : vector<8x1xf32>
    %cst_8 = arith.constant 3.000000e+00 : f32
    %16 = vector.broadcast %cst_8 : f32 to vector<8x1xf32>
    %17 = arith.subf %16, %12 : vector<8x1xf32>
    %cst_9 = arith.constant 0.000000e+00 : f32
    %18 = vector.broadcast %cst_9 : f32 to vector<8x1xf32>
    %19 = arith.maximumf %17, %18 : vector<8x1xf32>
    %20 = arith.mulf %19, %19 : vector<8x1xf32>
    %21 = arith.mulf %5, %20 : vector<8x1xf32>
    %22 = arith.addf %15, %21 : vector<8x1xf32>
    %c0_10 = arith.constant 0 : index
    %c0_11 = arith.constant 0 : index
    %23 = vector.load %arg5[%c0_10, %c0_11] : memref<1x1xf32, #tpu.memory_space<vmem>>, vector<1x1xf32>
    %24 = vector.shape_cast %22 : vector<8x1xf32> to vector<1x8x1xf32>
    %cst_12 = arith.constant dense<0.000000e+00> : vector<1xf32>
    %25 = vector.multi_reduction <add>, %24, %cst_12 [1, 2] : vector<1x8x1xf32> to vector<1xf32>
    %26 = vector.shape_cast %25 : vector<1xf32> to vector<1x1x1xf32>
    %27 = vector.extract %26[0, 0, 0] : f32 from vector<1x1x1xf32>
    %28 = vector.broadcast %27 : f32 to vector<1x1xf32>
    %29 = arith.addf %23, %28 : vector<1x1xf32>
    %c0_13 = arith.constant 0 : index
    %c0_14 = arith.constant 0 : index
    %30 = vector.load %arg5[%c0_13, %c0_14] : memref<1x1xf32, #tpu.memory_space<vmem>>, vector<1x1xf32>
    tpu.vector_store %arg5[%c0_13, %c0_14], %29 {strides = array<i32>} : memref<1x1xf32, #tpu.memory_space<vmem>>, vector<1x1xf32>,
    %c0_i32_15 = arith.constant 0 : i32
    %31 = arith.cmpi eq, %arg0, %c0_i32_15 : i32
    %32 = arith.extui %31 : i1 to i32
    %c0_i32_16 = arith.constant 0 : i32
    %33 = arith.cmpi ne, %32, %c0_i32_16 : i32
    scf.if %33 {
      %c0_17 = arith.constant 0 : index
      %c0_18 = arith.constant 0 : index
      %34 = vector.load %arg5[%c0_17, %c0_18] : memref<1x1xf32, #tpu.memory_space<vmem>>, vector<1x1xf32>
      %cst_19 = arith.constant 1.250000e-01 : f32
      %35 = vector.broadcast %cst_19 : f32 to vector<1x1xf32>
      %36 = arith.mulf %34, %35 : vector<1x1xf32>
      %c0_20 = arith.constant 0 : index
      %c0_21 = arith.constant 0 : index
      %37 = vector.load %arg4[%c0_20, %c0_21] : memref<1x1xf32, #tpu.memory_space<vmem>>, vector<1x1xf32>
      tpu.vector_store %arg4[%c0_20, %c0_21], %36 {strides = array<i32>} : memref<1x1xf32, #tpu.memory_space<vmem>>, vector<1x1xf32>,
    } else {
    }
    return
  }
  func.func @transform_0(%arg0: i32) -> (i32, i32) {
    %c0_i32 = arith.constant 0 : i32
    %c0_i32_0 = arith.constant 0 : i32
    return %arg0, %c0_i32 : i32, i32
  }
  func.func @transform_1(%arg0: i32) -> (i32, i32) {
    %c0_i32 = arith.constant 0 : i32
    %c0_i32_0 = arith.constant 0 : i32
    return %arg0, %c0_i32 : i32, i32
  }
  func.func @transform_2(%arg0: i32) -> (i32, i32) {
    %c0_i32 = arith.constant 0 : i32
    %c0_i32_0 = arith.constant 0 : i32
    return %arg0, %c0_i32 : i32, i32
  }
  func.func @transform_3(%arg0: i32) -> (i32, i32) {
    %c0_i32 = arith.constant 0 : i32
    %c0_i32_0 = arith.constant 0 : i32
    %c0_i32_1 = arith.constant 0 : i32
    return %c0_i32, %c0_i32_0 : i32, i32
  }
}

</mosaic_0001>

<llo_original>
// kernel: tpu_custom_call.1
$region0: #{tpu_custom_call.1}
  #allocation0 [shape = 'u32[]', space=smem, size = 0x4, offset = 0x4, fixed_abs, tag = 'smem constant byte address 0x4 - core index']
  #allocation1 [shape = 'u32[72,128]{1,0:T(1,128)}', space=vmem, size = 0x9000, scoped, tag = 'internal scratch']
  #allocation2 [shape = 'f32[1,1]{1,0:T(1,128)}', space=vmem, size = 0x200, scoped, tag = 'scratch operand']
  %s0 = inlined_call_operand.vmem [shape: f32[8,32], index: 0, kind: input, shape index: {}]
  %s1 = inlined_call_operand.hbm [shape: f32[8,32], index: 1, kind: input, shape index: {}]
  %s2 = inlined_call_operand.vmem [shape: f32[8,1], index: 2, kind: input, shape index: {}]
  %s3 = inlined_call_operand.hbm [shape: f32[1,1], index: 3, kind: output, shape index: {}]
  %s4 = sld [smem:[#allocation0]]
  $region34: #{tpu_custom_call.1} parent=0
    _
  %s6 = ssub.s32 1, %s4
  %s7 = scalar_select 0, %s6, %s4
  $region1: #{tpu_custom_call.1} parent=0
    #allocation3 [shape = 'u8[4096]{0}', space=vmem, size = 0x1000, scoped, tag = 'input window, operand 1, single buffered']
    #allocation4 [shape = 's32[1]{0}', space=sflag, size = 0x4, scoped, tag = 'scoped memory for tpu_custom_call.1']
    #allocation5 [shape = 's32[1]{0}', space=sflag, size = 0x4, scoped, tag = 'scoped memory for tpu_custom_call.1']
    #allocation6 [shape = 'u8[512]{0}', space=vmem, size = 0x400, scoped, tag = 'output window, operand 0, single buffered']
    %8 = vsyncpa [#allocation4], 0
    %9 = vsyncpa [#allocation5], 0
    // Predicated region
    $region2: #{tpu_custom_call.1} parent=1 // pred_check
      _
    $region3: #{tpu_custom_call.1} parent=1 // pred_check_branch
      %11 = sbr.rel (0) target = $region5
    $region4: #{tpu_custom_call.1} parent=1 // pred_region
      _
    $region5: #{tpu_custom_call.1} parent=1 // pred_fallthru
      _
    // Predicated region
    $region6: #{tpu_custom_call.1} parent=1 // pred_check
      _
    $region7: #{tpu_custom_call.1} parent=1 // pred_check_branch
      %13 = sbr.rel (0) target = $region9
    $region8: #{tpu_custom_call.1} parent=1 // pred_region
      %15 = vsyncadd [#allocation4], 0
      %s17 = sshll.u32 %s1, 4
      %s18 = int_to_ptr.hbm [resolvable:$true] %s17
      %s19 = sshll.u32 [#allocation3], 4
      %s20 = int_to_ptr.vmem [resolvable:$true] %s19
      %22 = dma.hbm_to_vmem [thread:$0]  %s18, 128, %s20, [#allocation4]
    $region9: #{tpu_custom_call.1} parent=1 // pred_fallthru
      _
    // Predicated region
    $region10: #{tpu_custom_call.1} parent=1 // pred_check
      _
    $region11: #{tpu_custom_call.1} parent=1 // pred_check_branch
      %24 = sbr.rel (0) target = $region13
    $region12: #{tpu_custom_call.1} parent=1 // pred_region
      _
    $region13: #{tpu_custom_call.1} parent=1 // pred_fallthru
      _
    // Predicated region
    $region14: #{tpu_custom_call.1} parent=1 // pred_check
      _
    $region15: #{tpu_custom_call.1} parent=1 // pred_check_branch
      %26 = sbr.rel (0) target = $region17
    $region16: #{tpu_custom_call.1} parent=1 // pred_region
      %28 = dma.done [#allocation4], 128
    $region17: #{tpu_custom_call.1} parent=1 // pred_fallthru
      _
    %p29 = scmp.eq.s32.totalorder 0, 0
    // Predicated region
    $region18: #{tpu_custom_call.1} parent=1 // pred_check
      %p30 = pneg %p29
    $region19: #{tpu_custom_call.1} parent=1 // pred_check_branch
      %32 = sbr.rel (%p30) target = $region21
    $region20: #{tpu_custom_call.1} parent=1 // pred_region
      %vm33 = vcmask 0
      %34 = vst.msk [vmem:[#allocation2] sm:$0x1] %vm33, 0.0
    $region21: #{tpu_custom_call.1} parent=1 // pred_fallthru
      _
    %v35 = vld [vmem:[%s0] sm:$0xff]
    %v36 = vld [vmem:[#allocation3] sm:$0xff]
    %v37 = vld [vmem:[%s2] sm:$0xff]
    %v38 = vsub.f32 %v35, %v36
    %v39 = vadd.f32 %v38, 1e-06
    %v40 = vmul.f32 %v39, %v39
    %vm41 = vcmask 261120
    %v42 = vsel %vm41, %v40, 0.0
    %43 = vadd.xlane.f32.xlu0 %v42
    %v44 = vpop.xlane.xlu0 %43
    %v45 = vrsqrt.pop %v44
    %v46 = vmul.f32 %v45, %v44
    %v47 = vmul.f32 %v46, %v45
    %v48 = vmul.f32 0.5, %v47
    %v49 = vsub.f32 1.5, %v48
    %v50 = vmul.f32 %v45, %v49
    %v51 = vmul.f32 %v44, %v50
    %vm52 = vcmp.eq.f32.partialorder %v44, inf
    %v53 = vsel %vm52, %v44, %v51
    %vm54 = vcmp.eq.f32.partialorder %v44, 0.0
    %v55 = vand.u32 %v44, 2147483648
    %v56 = vsel %vm54, %v55, %v53
    %v57 = vsub.f32 1.0, %v37
    %v58 = vmul.f32 %v57, %v44
    %v59 = vsub.f32 3.0, %v56
    %v60 = vmax.f32 %v59, 0.0
    %v61 = vmul.f32 %v60, %v60
    %v62 = vmul.f32 %v37, %v61
    %v63 = vadd.f32 %v58, %v62
    %v64 = vld [vmem:[#allocation2] sm:$0x1]
    %vm65 = vcmask 7168
    %v66 = vsel %vm65, %v63, 0.0
    %67 = vadd.xlane.f32.xlu0 %v66
    %v68 = vpop.xlane.xlu0 %67
    %v69 = vrot.slane %v68, 4
    %v70 = vadd.f32 %v68, %v69
    %v71 = vrot.slane %v70, 2
    %v72 = vadd.f32 %v70, %v71
    %v73 = vrot.slane %v72, 1
    %v74 = vadd.f32 %v72, %v73
    %s75 = vtos %v74
    %v76 = vstv %s75
    %v77 = vadd.f32 %v64, %v76
    %vm78 = vcmask 0
    %79 = vst.msk [vmem:[#allocation2] sm:$0x1] %vm78, %v77
    // Predicated region
    $region22: #{tpu_custom_call.1} parent=1 // pred_check
      %p80 = pneg %p29
    $region23: #{tpu_custom_call.1} parent=1 // pred_check_branch
      %82 = sbr.rel (%p80) target = $region25
    $region24: #{tpu_custom_call.1} parent=1 // pred_region
      %v83 = vld [vmem:[#allocation2] sm:$0x1]
      %v84 = vmul.f32 %v83, 0.125
      %85 = vst.msk [vmem:[#allocation6] sm:$0x1] %vm78, %v84
    $region25: #{tpu_custom_call.1} parent=1 // pred_fallthru
      _
    // Predicated region
    $region26: #{tpu_custom_call.1} parent=1 // pred_check
      _
    $region27: #{tpu_custom_call.1} parent=1 // pred_check_branch
      %87 = sbr.rel (0) target = $region29
    $region28: #{tpu_custom_call.1} parent=1 // pred_region
      %89 = vsyncadd [#allocation5], 0
      %s91 = sshll.u32 [#allocation6], 4
      %s92 = int_to_ptr.vmem [resolvable:$true] %s91
      %s93 = sshll.u32 %s3, 4
      %s94 = int_to_ptr.hbm [resolvable:$true] %s93
      %96 = dma.vmem_to_hbm [thread:$0]  %s92, 16, %s94, [#allocation5]
    $region29: #{tpu_custom_call.1} parent=1 // pred_fallthru
      _
    // Predicated region
    $region30: #{tpu_custom_call.1} parent=1 // pred_check
      _
    $region31: #{tpu_custom_call.1} parent=1 // pred_check_branch
      %98 = sbr.rel (0) target = $region33
    $region32: #{tpu_custom_call.1} parent=1 // pred_region
      %100 = dma.done [#allocation5], 16
    $region33: #{tpu_custom_call.1} parent=1 // pred_fallthru
      _
    %101 = vsyncpa [#allocation4], 1
    %102 = vsyncpa [#allocation5], 1

</llo_original>
